<compile_context>
chip_gen: v7x
topology: tpu7x:2x2x1
jax: 0.10.0
libtpu: 0.0.40
codegen_flags: <defaults>
</compile_context>

<pallas_src>
import functools

import jax
import jax.numpy as jnp
from jax.experimental import pallas as pl
from jax.experimental.pallas import tpu as pltpu


def _round_up(x, m):
    return (x + m - 1) // m * m


def _linear_block_stack_kernel(*refs, n_layers, compute_dtype):
    # refs = (x_ref, w0_ref, b0_ref, w1_ref, b1_ref, ..., o_ref)
    x_ref, o_ref = refs[0], refs[-1]
    h = x_ref[...].astype(jnp.float32)
    for i in range(n_layers):
        w = refs[1 + 2 * i][...]
        b = refs[2 + 2 * i][...].astype(jnp.float32)   # (1, OUT) broadcasts
        acc = jnp.dot(h.astype(compute_dtype), w.astype(compute_dtype),
                      preferred_element_type=jnp.float32)
        h = jnp.tanh(acc + b)
    o_ref[...] = h.astype(o_ref.dtype)


def _prepare_params(params, *, lane, weight_dtype):
    """Flatten [(W, b), ...] -> [W0, b0, W1, b1, ...].

    If lane > 0, every layer's output width (and therefore the next layer's
    input width) is zero-padded up to a multiple of `lane` so stores are
    lane-dense.  Padding is exact: padded output columns get bias 0 ->
    tanh(0) = 0, and the padded input rows of the next W are zero.
    The first layer's input width is never padded (x stays untouched).
    """
    flat = []
    prev_out_pad = None
    for (w, b) in params:
        in_f, out_f = w.shape
        in_p = in_f if prev_out_pad is None else prev_out_pad
        out_p = _round_up(out_f, lane) if lane else out_f
        w_p = jnp.pad(w, ((0, in_p - in_f), (0, out_p - out_f))).astype(weight_dtype)
        b_p = jnp.pad(b.reshape(1, -1),
                      ((0, 0), (0, out_p - out_f))).astype(jnp.float32)
        flat += [w_p, b_p]
        prev_out_pad = out_p
    pbytes = sum(int(a.size) * a.dtype.itemsize for a in flat)
    return flat, (prev_out_pad if prev_out_pad is not None else params[-1][0].shape[1]), pbytes


def linear_block_forward(x, params, *, block_b=1024, use_bf16=False):
    """Fused forward for one or more stacked LinearBlocks (Linear + Tanh).

    x: (B, IN) float32.
    params: list of (W, b); W has shape (in_features, out_features)
            (i.e. PyTorch weight.T) and b has shape (out_features,).
    """
    B, IN = x.shape
    OUT = params[-1][0].shape[1]
    n_layers = len(params)
    weight_dtype = jnp.bfloat16 if use_bf16 else jnp.float32
    compute_dtype = jnp.bfloat16 if use_bf16 else jnp.float32

    kernel = functools.partial(_linear_block_stack_kernel,
                               n_layers=n_layers, compute_dtype=compute_dtype)

    if B <= block_b:
        # ---- Small batch: single gridless block, no row/lane padding at all.
        flat, out_pad, pbytes = _prepare_params(
            params, lane=0, weight_dtype=weight_dtype)
        flops = sum(2 * B * w.shape[0] * w.shape[1] for w, _ in params)
        transc = sum(B * w.shape[1] for w, _ in params)
        bytes_accessed = (int(x.size) + B * OUT) * x.dtype.itemsize + pbytes
        vmem_limit = min(64 << 20,
                         max(8 << 20, 2 * (pbytes + bytes_accessed) + (2 << 20)))
        vmem_spec = pl.BlockSpec(memory_space=pltpu.MemorySpace.VMEM)
        out = pl.pallas_call(
            kernel,
            out_shape=jax.ShapeDtypeStruct((B, OUT), x.dtype),
            in_specs=[vmem_spec] * (1 + len(flat)),
            out_specs=vmem_spec,
            compiler_params=pltpu.CompilerParams(vmem_limit_bytes=vmem_limit),
            cost_estimate=pl.CostEstimate(
                flops=flops, transcendentals=transc,
                bytes_accessed=bytes_accessed),
        )(x, *flat)
        return out

    # ---- Large batch: tile only the batch axis (grid >= 2 by construction,
    # so "parallel" actually splits work across v7x's two TensorCores).
    # Weights stay VMEM-resident (constant index_map); features lane-padded.
    flat, out_pad, pbytes = _prepare_params(
        params, lane=128, weight_dtype=weight_dtype)
    Bp = _round_up(B, block_b)
    x_p = jnp.pad(x, ((0, Bp - B), (0, 0))) if Bp != B else x
    grid = (Bp // block_b,)

    flops = sum(2 * Bp * w.shape[0] * w.shape[1] for w in flat[::2])
    transc = sum(Bp * w.shape[1] for w in flat[::2])
    bytes_accessed = (int(x_p.size) * x.dtype.itemsize
                      + Bp * out_pad * x.dtype.itemsize + pbytes)

    max_width = max([IN] + [w.shape[1] for w in flat[::2]])
    act_tile_bytes = block_b * max_width * 4
    vmem_limit = min(64 << 20,
                     max(8 << 20,
                         2 * pbytes                       # double-buffered params
                         + 2 * block_b * IN * 4           # x tile (x2 buffers)
                         + 2 * block_b * out_pad * 4      # out tile (x2 buffers)
                         + 2 * act_tile_bytes             # live intermediates
                         + (4 << 20)))

    in_specs = [pl.BlockSpec((block_b, IN), lambda i: (i, 0))]
    for a in flat:
        in_specs.append(pl.BlockSpec(a.shape, lambda i: (0, 0)))

    out = pl.pallas_call(
        kernel,
        out_shape=jax.ShapeDtypeStruct((Bp, out_pad), x.dtype),
        grid=grid,
        in_specs=in_specs,
        out_specs=pl.BlockSpec((block_b, out_pad), lambda i: (i, 0)),
        compiler_params=pltpu.CompilerParams(
            dimension_semantics=("parallel",),
            vmem_limit_bytes=vmem_limit),
        cost_estimate=pl.CostEstimate(
            flops=flops, transcendentals=transc,
            bytes_accessed=bytes_accessed),
    )(x_p, *flat)
    return out[:B, :OUT]


if __name__ == "__main__":
    key = jax.random.PRNGKey(0)

    # --- Single LinearBlock: in=32 -> out=64, batch=2 (matches the module). ---
    batch, in_features, out_features = 2, 32, 64
    key, xk, wk, bk = jax.random.split(key, 4)
    x = jax.random.normal(xk, (batch, in_features), dtype=jnp.float32)
    w = jax.random.normal(wk, (in_features, out_features),
                          dtype=jnp.float32) / jnp.sqrt(in_features)
    b = jax.random.normal(bk, (out_features,), dtype=jnp.float32) * 0.1

    y = jax.block_until_ready(linear_block_forward(x, [(w, b)]))
    ref = jnp.tanh(x @ w + b)
    assert y.shape == (batch, out_features)
    assert jnp.allclose(y, ref, atol=1e-5, rtol=1e-5)

    # --- Stack of LinearBlocks, batch-tiled path (grid = 3 tiles of 1024). ---
    widths = (32, 64, 64, 8)
    big_batch = 2200
    key, xk2 = jax.random.split(key)
    x2 = jax.random.normal(xk2, (big_batch, widths[0]), dtype=jnp.float32)
    params = []
    for i in range(len(widths) - 1):
        key, kw, kb = jax.random.split(key, 3)
        wi = jax.random.normal(kw, (widths[i], widths[i + 1]),
                               dtype=jnp.float32) / jnp.sqrt(widths[i])
        bi = jax.random.normal(kb, (widths[i + 1],), dtype=jnp.float32) * 0.1
        params.append((wi, bi))

    ref2 = x2
    for wi, bi in params:
        ref2 = jnp.tanh(ref2 @ wi + bi)

    y2 = jax.block_until_ready(linear_block_forward(x2, params))
    assert y2.shape == (big_batch, widths[-1])
    assert jnp.allclose(y2, ref2, atol=1e-5, rtol=1e-5)

    # --- Optional bf16-MXU path (f32 accumulate), loose tolerance. ---
    y3 = jax.block_until_ready(linear_block_forward(x2, params, use_bf16=True))
    assert y3.shape == (big_batch, widths[-1])
    assert float(jnp.max(jnp.abs(y3 - ref2))) < 1e-1

    print("KERNEL_OK")
</pallas_src>

<mosaic_0001>
module attributes {stable_mosaic.version = 11 : i64} {
  func.func @_linear_block_stack_kernel(%arg0: memref<2x32xf32, #tpu.memory_space<vmem>>, %arg1: memref<32x64xf32, #tpu.memory_space<vmem>>, %arg2: memref<1x64xf32, #tpu.memory_space<vmem>>, %arg3: memref<2x64xf32, #tpu.memory_space<vmem>>) attributes {dimension_semantics = [], scalar_prefetch = 0 : i64, scratch_operands = 0 : i64, tpu.core_type = #tpu.core_type<tc>} {
    %c0 = arith.constant 0 : index
    %c0_0 = arith.constant 0 : index
    %0 = vector.load %arg0[%c0, %c0_0] : memref<2x32xf32, #tpu.memory_space<vmem>>, vector<2x32xf32>
    %c0_1 = arith.constant 0 : index
    %c0_2 = arith.constant 0 : index
    %1 = vector.load %arg1[%c0_1, %c0_2] : memref<32x64xf32, #tpu.memory_space<vmem>>, vector<32x64xf32>
    %c0_3 = arith.constant 0 : index
    %c0_4 = arith.constant 0 : index
    %2 = vector.load %arg2[%c0_3, %c0_4] : memref<1x64xf32, #tpu.memory_space<vmem>>, vector<1x64xf32>
    %cst = arith.constant dense<0.000000e+00> : vector<2x64xf32>
    %3 = tpu.matmul %0, %1, %cst {dimension_numbers = #tpu.dot_dimension_numbers<[1], [0], [0], [1], [0, 0, 1, 1], [], []>} : vector<2x32xf32>, vector<32x64xf32>, vector<2x64xf32> -> vector<2x64xf32>
    %4 = vector.broadcast %2 : vector<1x64xf32> to vector<2x64xf32>
    %5 = arith.addf %3, %4 : vector<2x64xf32>
    %6 = math.tanh %5 : vector<2x64xf32>
    %c0_5 = arith.constant 0 : index
    %c0_6 = arith.constant 0 : index
    %7 = vector.load %arg3[%c0_5, %c0_6] : memref<2x64xf32, #tpu.memory_space<vmem>>, vector<2x64xf32>
    tpu.vector_store %arg3[%c0_5, %c0_6], %6 {strides = array<i32>} : memref<2x64xf32, #tpu.memory_space<vmem>>, vector<2x64xf32>,
    return
  }
}

</mosaic_0001>

<llo_original>
// kernel: tpu_custom_call.1
$region0: #{tpu_custom_call.1}
  #allocation0 [shape = 'u32[]', space=smem, size = 0x4, offset = 0x4, fixed_abs, tag = 'smem constant byte address 0x4 - core index']
  #allocation1 [shape = 'u32[144,128]{1,0:T(1,128)}', space=vmem, size = 0x12000, scoped, tag = 'internal scratch']
  %s0 = inlined_call_operand.hbm [shape: f32[2,32], index: 0, kind: input, shape index: {}]
  %s1 = inlined_call_operand.hbm [shape: f32[32,64], index: 1, kind: input, shape index: {}]
  %s2 = inlined_call_operand.vmem [shape: f32[1,64], index: 2, kind: input, shape index: {}]
  %s3 = inlined_call_operand.hbm [shape: f32[2,64], index: 3, kind: output, shape index: {}]
  %s4 = sld [smem:[#allocation0]]
  $region30: #{tpu_custom_call.1} parent=0
    _
  %s6 = ssub.s32 1, %s4
  %s7 = scalar_select 0, %s6, %s4
  $region1: #{tpu_custom_call.1} parent=0
    #allocation2 [shape = 'u8[1024]{0}', space=vmem, size = 0x400, scoped, tag = 'input window, operand 0, single buffered']
    #allocation3 [shape = 's32[1]{0}', space=sflag, size = 0x4, scoped, tag = 'scoped memory for tpu_custom_call.1']
    #allocation4 [shape = 's32[1]{0}', space=sflag, size = 0x4, scoped, tag = 'scoped memory for tpu_custom_call.1']
    #allocation5 [shape = 'u8[16384]{0}', space=vmem, size = 0x4000, scoped, tag = 'input window, operand 1, single buffered']
    #allocation6 [shape = 's32[1]{0}', space=sflag, size = 0x4, scoped, tag = 'scoped memory for tpu_custom_call.1']
    #allocation7 [shape = 'u8[1024]{0}', space=vmem, size = 0x400, scoped, tag = 'output window, operand 0, single buffered']
    %8 = vsyncpa [#allocation3], 0
    %9 = vsyncpa [#allocation6], 0
    %10 = vsyncpa [#allocation4], 0
    // Predicated region
    $region2: #{tpu_custom_call.1} parent=1 // pred_check
      _
    $region3: #{tpu_custom_call.1} parent=1 // pred_check_branch
      %12 = sbr.rel (0) target = $region5
    $region4: #{tpu_custom_call.1} parent=1 // pred_region
      %s14 = ssub.s32 32, 32
      %15 = vsyncadd [#allocation3], %s14
      %s17 = sshll.u32 [#allocation2], 4
      %s18 = int_to_ptr.vmem [resolvable:$true] %s17
      %20 = dma.hbm_to_vmem [thread:$0]  %s0, 32, %s18, [#allocation3]
    $region5: #{tpu_custom_call.1} parent=1 // pred_fallthru
      _
    // Predicated region
    $region6: #{tpu_custom_call.1} parent=1 // pred_check
      _
    $region7: #{tpu_custom_call.1} parent=1 // pred_check_branch
      %22 = sbr.rel (0) target = $region9
    $region8: #{tpu_custom_call.1} parent=1 // pred_region
      %s24 = ssub.s32 512, 512
      %25 = vsyncadd [#allocation6], %s24
      %s26 = sshll.u32 [#allocation5], 4
      %s27 = int_to_ptr.vmem [resolvable:$true] %s26
      %32 = dma.hbm_to_vmem [thread:$0]  %s1, 512, %s27, [#allocation6], 128, 128, 8
    $region9: #{tpu_custom_call.1} parent=1 // pred_fallthru
      _
    // Predicated region
    $region10: #{tpu_custom_call.1} parent=1 // pred_check
      _
    $region11: #{tpu_custom_call.1} parent=1 // pred_check_branch
      %34 = sbr.rel (0) target = $region13
    $region12: #{tpu_custom_call.1} parent=1 // pred_region
      _
    $region13: #{tpu_custom_call.1} parent=1 // pred_fallthru
      _
    // Predicated region
    $region14: #{tpu_custom_call.1} parent=1 // pred_check
      _
    $region15: #{tpu_custom_call.1} parent=1 // pred_check_branch
      %36 = sbr.rel (0) target = $region17
    $region16: #{tpu_custom_call.1} parent=1 // pred_region
      %37 = dma.done [#allocation3], 32
    $region17: #{tpu_custom_call.1} parent=1 // pred_fallthru
      _
    // Predicated region
    $region18: #{tpu_custom_call.1} parent=1 // pred_check
      _
    $region19: #{tpu_custom_call.1} parent=1 // pred_check_branch
      %39 = sbr.rel (0) target = $region21
    $region20: #{tpu_custom_call.1} parent=1 // pred_region
      %40 = dma.done [#allocation6], 512
    $region21: #{tpu_custom_call.1} parent=1 // pred_fallthru
      _
    %v41 = vld [vmem:[#allocation2] sm:$0x3]
    %v42 = vld [vmem:[#allocation5] sm:$0xff]
    %v43 = vld [vmem:[#allocation5 + $0x8] sm:$0xff]
    %v44 = vld [vmem:[#allocation5 + $0x10] sm:$0xff]
    %v45 = vld [vmem:[#allocation5 + $0x18] sm:$0xff]
    %v46 = vld [vmem:[%s2] sm:$0x1]
    %v48 = vlaneseq
    %v49 = vshrl.u32 %v48, 7
    %v50 = vsub.s32 0, %v49
    %v51 = vrot.slane %v46, %v50
    %vm53 = vcmask 261120
    %v55 = vsel %vm53, %v41, 0
    %57 = vmatprep.subr.mxu0 0.0
    %58 = vmatpush1.msra.mxu0 %v42
    %59 = vmatprep.subr.mxu0 0.0
    %60 = vmatpush1.msra.mxu0 %v43
    %61 = vmatprep.subr.mxu0 0.0
    %62 = vmatpush1.msra.mxu0 %v44
    %63 = vmatprep.subr.mxu0 0.0
    %64 = vmatpush1.msra.mxu0 %v45
    %65 = vmatprep.subr.mxu0 0.0
    %66 = vmatpush1.msra.mxu0 0.0
    %67 = vmatprep.subr.mxu0 0.0
    %68 = vmatpush1.msra.mxu0 0.0
    %69 = vmatprep.subr.mxu0 0.0
    %70 = vmatpush1.msra.mxu0 0.0
    %71 = vmatprep.subr.mxu0 0.0
    %72 = vmatpush1.msra.mxu0 0.0
    %73 = vmatprep.subr.mxu0 0.0
    %74 = vmatpush1.msra.mxu0 0.0
    %75 = vmatprep.subr.mxu0 0.0
    %76 = vmatpush1.msra.mxu0 0.0
    %77 = vmatprep.subr.mxu0 0.0
    %78 = vmatpush1.msra.mxu0 0.0
    %79 = vmatprep.subr.mxu0 0.0
    %80 = vmatpush1.msra.mxu0 0.0
    %81 = vmatprep.subr.mxu0 0.0
    %82 = vmatpush1.msra.mxu0 0.0
    %83 = vmatprep.subr.mxu0 0.0
    %84 = vmatpush1.msra.mxu0 0.0
    %85 = vmatprep.subr.mxu0 0.0
    %86 = vmatpush1.msra.mxu0 0.0
    %87 = vmatprep.subr.mxu0 0.0
    %88 = vmatpush1.msra.mxu0 0.0
    %89 = vmatprep.subr.mxu0 0.0
    %90 = vmatpush1.msra.mxu0 0.0
    %91 = vmatprep.subr.mxu0 0.0
    %92 = vmatpush1.msra.mxu0 0.0
    %93 = vmatprep.subr.mxu0 0.0
    %94 = vmatpush1.msra.mxu0 0.0
    %95 = vmatprep.subr.mxu0 0.0
    %96 = vmatpush1.msra.mxu0 0.0
    %97 = vmatprep.subr.mxu0 0.0
    %98 = vmatpush1.msra.mxu0 0.0
    %99 = vmatprep.subr.mxu0 0.0
    %100 = vmatpush1.msra.mxu0 0.0
    %101 = vmatprep.subr.mxu0 0.0
    %102 = vmatpush1.msra.mxu0 0.0
    %103 = vmatprep.subr.mxu0 0.0
    %104 = vmatpush1.msra.mxu0 0.0
    %105 = vmatprep.subr.mxu0 0.0
    %106 = vmatpush1.msra.mxu0 0.0
    %107 = vmatprep.subr.mxu0 0.0
    %108 = vmatpush1.msra.mxu0 0.0
    %109 = vmatprep.subr.mxu0 0.0
    %110 = vmatpush1.msra.mxu0 0.0
    %111 = vmatprep.subr.mxu0 0.0
    %112 = vmatpush1.msra.mxu0 0.0
    %113 = vmatprep.subr.mxu0 0.0
    %114 = vmatpush1.msra.mxu0 0.0
    %115 = vmatprep.subr.mxu0 0.0
    %116 = vmatpush1.msra.mxu0 0.0
    %117 = vmatprep.subr.mxu0 0.0
    %118 = vmatpush1.msra.mxu0 0.0
    %119 = vmatprep.subr.mxu0 0.0
    %120 = vmatpush1.msra.mxu0 0.0
    %121 = vmatprep.mubr.f32.mxu0 0.0
    %122 = vmatmul.mubr.f32.gmra.mrb[0].mxu0 %v55
    %v123 = vpop.f32.mrb[0].mxu0
    %v124 = vadd.f32 %v51, %v123
    %v125 = vpop.f32.mrb[0].mxu0
    %126 = vdwg.mxu0
    %v127 = vtanh.pop %v124
    %vm128 = vcmask 517120
    %129 = vst.msk [vmem:[#allocation7] sm:$0x3] %vm128, %v127
    // Predicated region
    $region22: #{tpu_custom_call.1} parent=1 // pred_check
      _
    $region23: #{tpu_custom_call.1} parent=1 // pred_check_branch
      %131 = sbr.rel (0) target = $region25
    $region24: #{tpu_custom_call.1} parent=1 // pred_region
      %s133 = ssub.s32 32, 32
      %134 = vsyncadd [#allocation4], %s133
      %s136 = sshll.u32 [#allocation7], 4
      %s137 = int_to_ptr.vmem [resolvable:$true] %s136
      %139 = dma.vmem_to_hbm [thread:$0]  %s137, 32, %s3, [#allocation4]
    $region25: #{tpu_custom_call.1} parent=1 // pred_fallthru
      _
    // Predicated region
    $region26: #{tpu_custom_call.1} parent=1 // pred_check
      _
    $region27: #{tpu_custom_call.1} parent=1 // pred_check_branch
      %141 = sbr.rel (0) target = $region29
    $region28: #{tpu_custom_call.1} parent=1 // pred_region
      %142 = dma.done [#allocation4], 32
    $region29: #{tpu_custom_call.1} parent=1 // pred_fallthru
      _
    %143 = vsyncpa [#allocation3], 1
    %144 = vsyncpa [#allocation6], 1
    %145 = vsyncpa [#allocation4], 1

</llo_original>
